<compile_context>
chip_gen: v6e
topology: v6e:2x2x1
jax: 0.10.0
libtpu: 0.0.40
codegen_flags: <defaults>
</compile_context>

<pallas_src>
import functools

import jax
import jax.numpy as jnp
from jax import lax
from jax.experimental import pallas as pl
from jax.experimental.pallas import tpu as pltpu

LANE = 128
SUBLANE = 8
CHUNK_ROWS = 32          # one int8 tile / two bf16 tiles / four f32 sublane tiles
ROW_ALIGN = 32           # block row dim must stay a multiple of the int8 (32,128) tile
MAX_BLOCK_ROWS = 4096    # (4096,128) f32 = 2 MiB/buffer; ~13 MiB total double-buffered
_N_STATS = 5             # [focal_sum, sq_sum, pos, true, true_pos]


def _cdiv(a, b):
    return (a + b - 1) // b


def _round_up(x, m):
    return (x + m - 1) // m * m


def _num_tensorcores():
    """Best-effort TensorCores-per-device (v4/v5p/v7x = 2, v5e/v6e = 1)."""
    try:
        kind = jax.devices()[0].device_kind.lower()
    except Exception:
        return 1
    if "v4" in kind or "v5p" in kind or "v7" in kind or "7x" in kind:
        return 2
    return 1


def _bcae_stats_kernel(clf_ref, reg_ref, tag_ref, adc_ref, out_ref, *,
                       gamma, gamma_int, eps, threshold,
                       rows_full, lane_rem, block_rows, n_inner):
    o = pl.program_id(0)          # "parallel" (megacore) axis
    i = pl.program_id(1)          # "arbitrary" (reduction) axis
    b = o * n_inner + i           # logical block index (may reach one past the end)
    base_row = b * block_rows

    @pl.when(i == 0)
    def _():
        out_ref[...] = jnp.zeros_like(out_ref)

    n_chunks = block_rows // CHUNK_ROWS

    def fold(x):
        # (CHUNK_ROWS, LANE) -> (8, LANE): tile-aligned reshape + VPU adds only.
        return jnp.sum(x.reshape(CHUNK_ROWS // SUBLANE, SUBLANE, LANE), axis=0)

    def make_body(masked):
        def body(c, carry):
            fl_a, sq_a, pos_a, true_a, tp_a = carry
            r0 = pl.multiple_of(c * CHUNK_ROWS, CHUNK_ROWS)
            clf = clf_ref[pl.ds(r0, CHUNK_ROWS), :].astype(jnp.float32)
            reg = reg_ref[pl.ds(r0, CHUNK_ROWS), :].astype(jnp.float32)
            adc = adc_ref[pl.ds(r0, CHUNK_ROWS), :].astype(jnp.float32)
            tagf = tag_ref[pl.ds(r0, CHUNK_ROWS), :].astype(jnp.float32)

            # classification mask / combined regression output / squared error
            mask = clf > threshold
            maskf = jnp.where(mask, 1.0, 0.0)
            combined = jnp.where(mask, reg, 0.0)
            diff = combined - adc
            sq = diff * diff

            # focal loss: log2 computed once; integer gamma stays on the VPU
            p0 = (1.0 - clf) + eps
            p1 = clf + eps
            lp0 = jnp.log2(p0)
            lp1 = jnp.log2(p1)
            if gamma_int is not None:
                pw0 = lax.integer_pow(p0, gamma_int)
                pw1 = lax.integer_pow(p1, gamma_int)
            else:
                pw0 = jnp.exp2(gamma * lp0)
                pw1 = jnp.exp2(gamma * lp1)
            fl = jnp.where(tagf > 0.5, pw0 * lp1, pw1 * lp0)
            tp = maskf * tagf

            if masked:
                # Only the boundary block (and a rare clamped duplicate step)
                # runs this path; all five stats are zeroed past the valid
                # region so stale VMEM / padded rows can never leak into sums.
                row = lax.broadcasted_iota(jnp.int32, (CHUNK_ROWS, LANE), 0)
                lane = lax.broadcasted_iota(jnp.int32, (CHUNK_ROWS, LANE), 1)
                grow = base_row + r0 + row
                valid = (grow < rows_full) | ((grow == rows_full) & (lane < lane_rem))
                fl = jnp.where(valid, fl, 0.0)
                sq = jnp.where(valid, sq, 0.0)
                maskf = jnp.where(valid, maskf, 0.0)
                tagf = jnp.where(valid, tagf, 0.0)
                tp = jnp.where(valid, tp, 0.0)

            return (fl_a + fold(fl), sq_a + fold(sq), pos_a + fold(maskf),
                    true_a + fold(tagf), tp_a + fold(tp))
        return body

    zeros = jnp.zeros((SUBLANE, LANE), jnp.float32)
    init = (zeros, zeros, zeros, zeros, zeros)
    unroll = max(1, min(4, n_chunks))

    def accumulate(masked):
        fl_a, sq_a, pos_a, true_a, tp_a = lax.fori_loop(
            0, n_chunks, make_body(masked), init, unroll=unroll)
        out_ref[0, 0] += fl_a
        out_ref[0, 1] += sq_a
        out_ref[0, 2] += pos_a
        out_ref[0, 3] += true_a
        out_ref[0, 4] += tp_a

    block_end = (b + 1) * block_rows

    @pl.when(block_end <= rows_full)      # hot path: no masking work at all
    def _():
        accumulate(False)

    @pl.when(block_end > rows_full)       # at most one boundary block per core
    def _():
        accumulate(True)


def bcae_stats(clf_output, reg_output, tag, adc, *, clf_threshold, gamma, eps,
               max_block_rows=MAX_BLOCK_ROWS):
    """One fused streaming pass; returns the scalar statistics of BCAELoss.forward."""
    total = clf_output.size
    rows_full, lane_rem = divmod(total, LANE)
    rows = rows_full + (1 if lane_rem else 0)

    if rows <= max_block_rows:
        block_rows = _round_up(max(rows, 1), ROW_ALIGN)
    else:
        block_rows = max_block_rows
    n_blocks = _cdiv(rows, block_rows)

    num_tc = _num_tensorcores()
    n_outer = num_tc if (num_tc > 1 and n_blocks >= 2) else 1
    n_inner = _cdiv(n_blocks, n_outer)
    max_block = n_blocks - 1

    def to2d(x):
        flat = x.reshape(-1)
        if flat.dtype not in (jnp.float32, jnp.bfloat16):
            flat = flat.astype(jnp.float32)
        if lane_rem:
            # rare ragged-lane fallback: pad only the <=127 element remainder
            flat = jnp.pad(flat, (0, LANE - lane_rem))
        return flat.reshape(rows, LANE)

    clf2d = to2d(clf_output)
    reg2d = to2d(reg_output)
    adc2d = to2d(adc)

    # tag: narrow int8 stream, padded to whole blocks so the packed-int8 stream
    # never needs a partial boundary DMA (~1 B/elem extra vs ~12 B/elem total).
    tag_rows = n_blocks * block_rows
    tag_flat = tag.reshape(-1)
    if tag_flat.dtype == jnp.bool_:
        tag_flat = tag_flat.astype(jnp.int8)
    else:
        tag_flat = (tag_flat != 0).astype(jnp.int8)   # robust for int/float labels
    pad = tag_rows * LANE - total
    if pad:
        tag_flat = jnp.pad(tag_flat, (0, pad))
    tag2d = tag_flat.reshape(tag_rows, LANE)

    gf = float(gamma)
    gamma_int = int(gf) if gf.is_integer() and 0 < gf <= 16 else None

    kernel = functools.partial(
        _bcae_stats_kernel,
        gamma=gf, gamma_int=gamma_int, eps=float(eps),
        threshold=float(clf_threshold),
        rows_full=rows_full, lane_rem=lane_rem,
        block_rows=block_rows, n_inner=n_inner)

    def data_map(o, i):
        # A trailing grid step past the last real block (uneven megacore split)
        # re-reads the last block; the kernel masks its contribution to zero.
        return (jnp.minimum(o * n_inner + i, max_block), 0)

    data_spec = pl.BlockSpec((block_rows, LANE), data_map)

    stats = pl.pallas_call(
        kernel,
        out_shape=jax.ShapeDtypeStruct((n_outer, _N_STATS, SUBLANE, LANE),
                                       jnp.float32),
        grid_spec=pltpu.PrefetchScalarGridSpec(
            num_scalar_prefetch=0,
            grid=(n_outer, n_inner),
            in_specs=[data_spec, data_spec, data_spec, data_spec],
            out_specs=pl.BlockSpec((1, _N_STATS, SUBLANE, LANE),
                                   lambda o, i: (o, 0, 0, 0)),
        ),
        compiler_params=pltpu.CompilerParams(
            dimension_semantics=("parallel", "arbitrary"),
            vmem_limit_bytes=32 * 1024 * 1024,
        ),
    )(clf2d, reg2d, tag2d, adc2d)

    sums = jnp.sum(stats, axis=(0, 2, 3))            # (5,) tiny final reduce
    inv_n = 1.0 / float(total)
    return {
        "loss_clf": -sums[0] * inv_n,
        "loss_reg": sums[1] * inv_n,
        "mse": sums[1] * inv_n,
        "pos": sums[2],
        "true": sums[3],
        "true_pos": sums[4],
    }


class BCAELoss:
    """JAX/Pallas port of BCAELoss (default config: FocalLoss + MSELoss)."""

    def __init__(self, *, clf_threshold=0.5, gamma=2, eps=1e-8,
                 reg_loss="mse", weight_pow=None):
        if gamma is None or weight_pow is not None or reg_loss != "mse":
            # TODO(synk): gamma=None (nn.BCELoss) and weight_pow target-weighted
            # L1/MSE branches are not fused into the Pallas kernel.
            raise NotImplementedError(
                "only the default FocalLoss + MSELoss path is implemented")
        self.clf_threshold = clf_threshold
        self.gamma = gamma
        self.eps = eps
        self.clf_coef = jnp.float32(2000.0)   # device scalar: no per-step host sync
        self.expo = 0.5

    def __call__(self, clf_output, reg_output, tag, adc):
        s = bcae_stats(clf_output, reg_output, tag, adc,
                       clf_threshold=self.clf_threshold,
                       gamma=self.gamma, eps=self.eps)
        loss_clf = s["loss_clf"]
        loss_reg = s["loss_reg"]
        # stateful clf_coef EMA, kept on-device (replaces torch .item()/isnan)
        new_coef = (self.expo * self.clf_coef + loss_reg / loss_clf) / (self.expo + 1.0)
        self.clf_coef = jnp.where(jnp.isnan(loss_clf),
                                  jnp.float32(2000.0), new_coef)
        return {
            "loss": loss_reg + self.clf_coef * loss_clf,
            "clf loss": loss_clf,
            "reg loss": loss_reg,
            "clf coef": self.clf_coef,
            "pos": s["pos"],
            "true": s["true"],
            "true pos": s["true_pos"],
            "mse": s["mse"],
        }


def bcae_ref(clf_output, reg_output, tag, adc, *, clf_threshold, gamma, eps):
    """Pure-JAX reference mirroring the PyTorch forward (default config)."""
    mask = clf_output > clf_threshold
    combined = reg_output * mask
    pos = jnp.sum(mask)
    true = jnp.sum(tag)
    true_pos = jnp.sum(mask & tag)
    mse = jnp.mean((combined - adc) ** 2)
    p0, p1 = 1.0 - clf_output + eps, clf_output + eps
    l1 = tag.astype(jnp.float32)
    l0 = 1.0 - l1
    fl = (jnp.power(p1, gamma) * jnp.log2(p0) * l0
          + jnp.power(p0, gamma) * jnp.log2(p1) * l1)
    loss_clf = -jnp.mean(fl)
    loss_reg = jnp.mean((combined - adc) ** 2)
    return loss_clf, loss_reg, pos, true, true_pos, mse


if __name__ == "__main__":
    key = jax.random.PRNGKey(0)
    k1, k2, k3, k4 = jax.random.split(key, 4)

    def make_inputs(shape):
        clf = jax.random.uniform(k1, shape, dtype=jnp.float32,
                                 minval=0.01, maxval=0.99)
        reg = jax.random.normal(k2, shape, dtype=jnp.float32)
        tg = jax.random.bernoulli(k3, 0.3, shape)          # bool, like torch
        ad = jax.random.normal(k4, shape, dtype=jnp.float32)
        return clf, reg, tg, ad

    def check_module(shape):
        clf, reg, tg, ad = make_inputs(shape)
        loss_mod = BCAELoss(clf_threshold=0.5, gamma=2, eps=1e-8)
        losses = loss_mod(clf, reg, tg, ad)
        jax.block_until_ready(losses["loss"])

        r_clf, r_reg, r_pos, r_true, r_tp, r_mse = bcae_ref(
            clf, reg, tg, ad, clf_threshold=0.5, gamma=2, eps=1e-8)
        assert jnp.allclose(losses["clf loss"], r_clf, rtol=1e-5, atol=1e-6), \
            (shape, float(losses["clf loss"]), float(r_clf))
        assert jnp.allclose(losses["reg loss"], r_reg, rtol=1e-5, atol=1e-6), \
            (shape, float(losses["reg loss"]), float(r_reg))
        assert jnp.allclose(losses["mse"], r_mse, rtol=1e-5, atol=1e-6)
        assert jnp.allclose(losses["pos"], r_pos.astype(jnp.float32), atol=0.5)
        assert jnp.allclose(losses["true"], r_true.astype(jnp.float32), atol=0.5)
        assert jnp.allclose(losses["true pos"], r_tp.astype(jnp.float32), atol=0.5)
        ref_coef = (0.5 * 2000.0 + float(r_reg) / float(r_clf)) / 1.5
        ref_loss = float(r_reg) + ref_coef * float(r_clf)
        assert jnp.allclose(losses["clf coef"], ref_coef, rtol=1e-5, atol=1e-5)
        assert jnp.allclose(losses["loss"], ref_loss, rtol=1e-5, atol=1e-5), \
            (shape, float(losses["loss"]), ref_loss)

    # lane-aligned input (2048 elements): no host-side padding path
    check_module((2, 4, 16, 16))
    # ragged input (total % 128 != 0): exercises the lane-remainder tail mask
    check_module((3, 5, 7, 11))

    # multi-block grid + unmasked hot path (exact block coverage, 256 rows / 64-row blocks)
    shape = (4, 8, 32, 32)
    clf, reg, tg, ad = make_inputs(shape)
    s = bcae_stats(clf, reg, tg, ad, clf_threshold=0.5, gamma=2, eps=1e-8,
                   max_block_rows=64)
    jax.block_until_ready(s["loss_clf"])
    r_clf, r_reg, r_pos, r_true, r_tp, r_mse = bcae_ref(
        clf, reg, tg, ad, clf_threshold=0.5, gamma=2, eps=1e-8)
    assert jnp.allclose(s["loss_clf"], r_clf, rtol=1e-5, atol=1e-6)
    assert jnp.allclose(s["loss_reg"], r_reg, rtol=1e-5, atol=1e-6)
    assert jnp.allclose(s["mse"], r_mse, rtol=1e-5, atol=1e-6)
    assert jnp.allclose(s["pos"], r_pos.astype(jnp.float32), atol=0.5)
    assert jnp.allclose(s["true"], r_true.astype(jnp.float32), atol=0.5)
    assert jnp.allclose(s["true_pos"], r_tp.astype(jnp.float32), atol=0.5)

    print("KERNEL_OK")
</pallas_src>

<mosaic_0001>
module attributes {stable_mosaic.version = 11 : i64} {
  func.func @_bcae_stats_kernel(%arg0: i32, %arg1: i32, %arg2: memref<32x128xf32, #tpu.memory_space<vmem>>, %arg3: memref<32x128xf32, #tpu.memory_space<vmem>>, %arg4: memref<32x128xi8, #tpu.memory_space<vmem>>, %arg5: memref<32x128xf32, #tpu.memory_space<vmem>>, %arg6: memref<1x5x8x128xf32, #tpu.memory_space<vmem>>) attributes {dimension_semantics = [#tpu.dimension_semantics<parallel>, #tpu.dimension_semantics<arbitrary>], iteration_bounds = array<i64: 1, 1>, scalar_prefetch = 0 : i64, scratch_operands = 0 : i64, tpu.core_type = #tpu.core_type<tc>, window_params = [{transform_indices = @transform_0, window_bounds = array<i64: 32, 128>}, {transform_indices = @transform_1, window_bounds = array<i64: 32, 128>}, {transform_indices = @transform_2, window_bounds = array<i64: 32, 128>}, {transform_indices = @transform_3, window_bounds = array<i64: 32, 128>}, {transform_indices = @transform_4, window_bounds = array<i64: 1, 5, 8, 128>}]} {
    %c1_i32 = arith.constant 1 : i32
    %0 = arith.muli %arg0, %c1_i32 : i32
    %1 = arith.addi %0, %arg1 : i32
    %c32_i32 = arith.constant 32 : i32
    %2 = arith.muli %1, %c32_i32 : i32
    %c0_i32 = arith.constant 0 : i32
    %3 = arith.cmpi eq, %arg1, %c0_i32 : i32
    %4 = arith.extui %3 : i1 to i32
    %c0_i32_0 = arith.constant 0 : i32
    %5 = arith.cmpi ne, %4, %c0_i32_0 : i32
    scf.if %5 {
      %cst_6 = arith.constant 0.000000e+00 : f32
      %15 = vector.broadcast %cst_6 : f32 to vector<1x5x8x128xf32>
      %c0 = arith.constant 0 : index
      %c0_7 = arith.constant 0 : index
      %c0_8 = arith.constant 0 : index
      %c0_9 = arith.constant 0 : index
      %16 = vector.load %arg6[%c0, %c0_7, %c0_8, %c0_9] : memref<1x5x8x128xf32, #tpu.memory_space<vmem>>, vector<1x5x8x128xf32>
      tpu.vector_store %arg6[%c0, %c0_7, %c0_8, %c0_9], %15 {strides = array<i32>} : memref<1x5x8x128xf32, #tpu.memory_space<vmem>>, vector<1x5x8x128xf32>,
    } else {
    }
    %cst = arith.constant 0.000000e+00 : f32
    %6 = vector.broadcast %cst : f32 to vector<8x128xf32>
    %c1_i32_1 = arith.constant 1 : i32
    %7 = arith.addi %1, %c1_i32_1 : i32
    %c32_i32_2 = arith.constant 32 : i32
    %8 = arith.muli %7, %c32_i32_2 : i32
    %c16_i32 = arith.constant 16 : i32
    %9 = arith.cmpi sle, %8, %c16_i32 : i32
    %10 = arith.extui %9 : i1 to i32
    %c0_i32_3 = arith.constant 0 : i32
    %11 = arith.cmpi ne, %10, %c0_i32_3 : i32
    scf.if %11 {
      %c0_i32_6 = arith.constant 0 : i32
      %c32_i32_7 = arith.constant 32 : i32
      %15 = arith.muli %c0_i32_6, %c32_i32_7 : i32
      %16 = tpu.assume_multiple %15, 32 : i32
      %17 = arith.index_cast %16 : i32 to index
      %c0 = arith.constant 0 : index
      %18 = vector.load %arg2[%17, %c0] : memref<32x128xf32, #tpu.memory_space<vmem>>, vector<32x128xf32>
      %19 = arith.index_cast %16 : i32 to index
      %c0_8 = arith.constant 0 : index
      %20 = vector.load %arg3[%19, %c0_8] : memref<32x128xf32, #tpu.memory_space<vmem>>, vector<32x128xf32>
      %21 = arith.index_cast %16 : i32 to index
      %c0_9 = arith.constant 0 : index
      %22 = vector.load %arg5[%21, %c0_9] : memref<32x128xf32, #tpu.memory_space<vmem>>, vector<32x128xf32>
      %23 = arith.index_cast %16 : i32 to index
      %c0_10 = arith.constant 0 : index
      %24 = vector.load %arg4[%23, %c0_10] : memref<32x128xi8, #tpu.memory_space<vmem>>, vector<32x128xi8>
      %25 = arith.sitofp %24 : vector<32x128xi8> to vector<32x128xf32>
      %cst_11 = arith.constant 5.000000e-01 : f32
      %26 = vector.broadcast %cst_11 : f32 to vector<32x128xf32>
      %27 = arith.cmpf ogt, %18, %26 : vector<32x128xf32>
      %cst_12 = arith.constant 1.000000e+00 : f32
      %cst_13 = arith.constant 0.000000e+00 : f32
      %28 = vector.broadcast %cst_12 : f32 to vector<32x128xf32>
      %29 = vector.broadcast %cst_13 : f32 to vector<32x128xf32>
      %30 = arith.select %27, %28, %29 : vector<32x128xi1>, vector<32x128xf32>
      %cst_14 = arith.constant 0.000000e+00 : f32
      %31 = vector.broadcast %cst_14 : f32 to vector<32x128xf32>
      %32 = arith.select %27, %20, %31 : vector<32x128xi1>, vector<32x128xf32>
      %33 = arith.subf %32, %22 : vector<32x128xf32>
      %34 = arith.mulf %33, %33 : vector<32x128xf32>
      %cst_15 = arith.constant 1.000000e+00 : f32
      %35 = vector.broadcast %cst_15 : f32 to vector<32x128xf32>
      %36 = arith.subf %35, %18 : vector<32x128xf32>
      %cst_16 = arith.constant 9.99999993E-9 : f32
      %37 = vector.broadcast %cst_16 : f32 to vector<32x128xf32>
      %38 = arith.addf %36, %37 : vector<32x128xf32>
      %cst_17 = arith.constant 9.99999993E-9 : f32
      %39 = vector.broadcast %cst_17 : f32 to vector<32x128xf32>
      %40 = arith.addf %18, %39 : vector<32x128xf32>
      %41 = math.log %38 : vector<32x128xf32>
      %cst_18 = arith.constant 2.000000e+00 : f32
      %42 = math.log %cst_18 : f32
      %43 = vector.broadcast %42 : f32 to vector<32x128xf32>
      %44 = arith.divf %41, %43 : vector<32x128xf32>
      %45 = math.log %40 : vector<32x128xf32>
      %cst_19 = arith.constant 2.000000e+00 : f32
      %46 = math.log %cst_19 : f32
      %47 = vector.broadcast %46 : f32 to vector<32x128xf32>
      %48 = arith.divf %45, %47 : vector<32x128xf32>
      %49 = arith.mulf %38, %38 : vector<32x128xf32>
      %50 = arith.mulf %40, %40 : vector<32x128xf32>
      %cst_20 = arith.constant 5.000000e-01 : f32
      %51 = vector.broadcast %cst_20 : f32 to vector<32x128xf32>
      %52 = arith.cmpf ogt, %25, %51 : vector<32x128xf32>
      %53 = arith.mulf %49, %48 : vector<32x128xf32>
      %54 = arith.mulf %50, %44 : vector<32x128xf32>
      %55 = arith.select %52, %53, %54 : vector<32x128xi1>, vector<32x128xf32>
      %56 = arith.mulf %30, %25 : vector<32x128xf32>
      %57 = vector.shape_cast %55 : vector<32x128xf32> to vector<4x8x128xf32>
      %cst_21 = arith.constant dense<0.000000e+00> : vector<8x128xf32>
      %58 = vector.multi_reduction <add>, %57, %cst_21 [0] : vector<4x8x128xf32> to vector<8x128xf32>
      %59 = arith.addf %6, %58 : vector<8x128xf32>
      %60 = vector.shape_cast %34 : vector<32x128xf32> to vector<4x8x128xf32>
      %cst_22 = arith.constant dense<0.000000e+00> : vector<8x128xf32>
      %61 = vector.multi_reduction <add>, %60, %cst_22 [0] : vector<4x8x128xf32> to vector<8x128xf32>
      %62 = arith.addf %6, %61 : vector<8x128xf32>
      %63 = vector.shape_cast %30 : vector<32x128xf32> to vector<4x8x128xf32>
      %cst_23 = arith.constant dense<0.000000e+00> : vector<8x128xf32>
      %64 = vector.multi_reduction <add>, %63, %cst_23 [0] : vector<4x8x128xf32> to vector<8x128xf32>
      %65 = arith.addf %6, %64 : vector<8x128xf32>
      %66 = vector.shape_cast %25 : vector<32x128xf32> to vector<4x8x128xf32>
      %cst_24 = arith.constant dense<0.000000e+00> : vector<8x128xf32>
      %67 = vector.multi_reduction <add>, %66, %cst_24 [0] : vector<4x8x128xf32> to vector<8x128xf32>
      %68 = arith.addf %6, %67 : vector<8x128xf32>
      %69 = vector.shape_cast %56 : vector<32x128xf32> to vector<4x8x128xf32>
      %cst_25 = arith.constant dense<0.000000e+00> : vector<8x128xf32>
      %70 = vector.multi_reduction <add>, %69, %cst_25 [0] : vector<4x8x128xf32> to vector<8x128xf32>
      %71 = arith.addf %6, %70 : vector<8x128xf32>
      %c1_i32_26 = arith.constant 1 : i32
      %c0_27 = arith.constant 0 : index
      %c0_28 = arith.constant 0 : index
      %c0_29 = arith.constant 0 : index
      %c0_30 = arith.constant 0 : index
      %72 = vector.load %arg6[%c0_27, %c0_28, %c0_29, %c0_30] : memref<1x5x8x128xf32, #tpu.memory_space<vmem>>, vector<1x1x8x128xf32>
      %73 = vector.shape_cast %72 : vector<1x1x8x128xf32> to vector<8x128xf32>
      %74 = arith.addf %73, %59 : vector<8x128xf32>
      %c0_31 = arith.constant 0 : index
      %c0_32 = arith.constant 0 : index
      %c0_33 = arith.constant 0 : index
      %c0_34 = arith.constant 0 : index
      %75 = vector.load %arg6[%c0_31, %c0_32, %c0_33, %c0_34] : memref<1x5x8x128xf32, #tpu.memory_space<vmem>>, vector<1x1x8x128xf32>
      %76 = vector.shape_cast %75 : vector<1x1x8x128xf32> to vector<8x128xf32>
      %77 = vector.shape_cast %74 : vector<8x128xf32> to vector<1x1x8x128xf32>
      tpu.vector_store %arg6[%c0_31, %c0_32, %c0_33, %c0_34], %77 {strides = array<i32>} : memref<1x5x8x128xf32, #tpu.memory_space<vmem>>, vector<1x1x8x128xf32>,
      %c0_35 = arith.constant 0 : index
      %c1 = arith.constant 1 : index
      %c0_36 = arith.constant 0 : index
      %c0_37 = arith.constant 0 : index
      %78 = vector.load %arg6[%c0_35, %c1, %c0_36, %c0_37] : memref<1x5x8x128xf32, #tpu.memory_space<vmem>>, vector<1x1x8x128xf32>
      %79 = vector.shape_cast %78 : vector<1x1x8x128xf32> to vector<8x128xf32>
      %80 = arith.addf %79, %62 : vector<8x128xf32>
      %c0_38 = arith.constant 0 : index
      %c1_39 = arith.constant 1 : index
      %c0_40 = arith.constant 0 : index
      %c0_41 = arith.constant 0 : index
      %81 = vector.load %arg6[%c0_38, %c1_39, %c0_40, %c0_41] : memref<1x5x8x128xf32, #tpu.memory_space<vmem>>, vector<1x1x8x128xf32>
      %82 = vector.shape_cast %81 : vector<1x1x8x128xf32> to vector<8x128xf32>
      %83 = vector.shape_cast %80 : vector<8x128xf32> to vector<1x1x8x128xf32>
      tpu.vector_store %arg6[%c0_38, %c1_39, %c0_40, %c0_41], %83 {strides = array<i32>} : memref<1x5x8x128xf32, #tpu.memory_space<vmem>>, vector<1x1x8x128xf32>,
      %c0_42 = arith.constant 0 : index
      %c2 = arith.constant 2 : index
      %c0_43 = arith.constant 0 : index
      %c0_44 = arith.constant 0 : index
      %84 = vector.load %arg6[%c0_42, %c2, %c0_43, %c0_44] : memref<1x5x8x128xf32, #tpu.memory_space<vmem>>, vector<1x1x8x128xf32>
      %85 = vector.shape_cast %84 : vector<1x1x8x128xf32> to vector<8x128xf32>
      %86 = arith.addf %85, %65 : vector<8x128xf32>
      %c0_45 = arith.constant 0 : index
      %c2_46 = arith.constant 2 : index
      %c0_47 = arith.constant 0 : index
      %c0_48 = arith.constant 0 : index
      %87 = vector.load %arg6[%c0_45, %c2_46, %c0_47, %c0_48] : memref<1x5x8x128xf32, #tpu.memory_space<vmem>>, vector<1x1x8x128xf32>
      %88 = vector.shape_cast %87 : vector<1x1x8x128xf32> to vector<8x128xf32>
      %89 = vector.shape_cast %86 : vector<8x128xf32> to vector<1x1x8x128xf32>
      tpu.vector_store %arg6[%c0_45, %c2_46, %c0_47, %c0_48], %89 {strides = array<i32>} : memref<1x5x8x128xf32, #tpu.memory_space<vmem>>, vector<1x1x8x128xf32>,
      %c0_49 = arith.constant 0 : index
      %c3 = arith.constant 3 : index
      %c0_50 = arith.constant 0 : index
      %c0_51 = arith.constant 0 : index
      %90 = vector.load %arg6[%c0_49, %c3, %c0_50, %c0_51] : memref<1x5x8x128xf32, #tpu.memory_space<vmem>>, vector<1x1x8x128xf32>
      %91 = vector.shape_cast %90 : vector<1x1x8x128xf32> to vector<8x128xf32>
      %92 = arith.addf %91, %68 : vector<8x128xf32>
      %c0_52 = arith.constant 0 : index
      %c3_53 = arith.constant 3 : index
      %c0_54 = arith.constant 0 : index
      %c0_55 = arith.constant 0 : index
      %93 = vector.load %arg6[%c0_52, %c3_53, %c0_54, %c0_55] : memref<1x5x8x128xf32, #tpu.memory_space<vmem>>, vector<1x1x8x128xf32>
      %94 = vector.shape_cast %93 : vector<1x1x8x128xf32> to vector<8x128xf32>
      %95 = vector.shape_cast %92 : vector<8x128xf32> to vector<1x1x8x128xf32>
      tpu.vector_store %arg6[%c0_52, %c3_53, %c0_54, %c0_55], %95 {strides = array<i32>} : memref<1x5x8x128xf32, #tpu.memory_space<vmem>>, vector<1x1x8x128xf32>,
      %c0_56 = arith.constant 0 : index
      %c4 = arith.constant 4 : index
      %c0_57 = arith.constant 0 : index
      %c0_58 = arith.constant 0 : index
      %96 = vector.load %arg6[%c0_56, %c4, %c0_57, %c0_58] : memref<1x5x8x128xf32, #tpu.memory_space<vmem>>, vector<1x1x8x128xf32>
      %97 = vector.shape_cast %96 : vector<1x1x8x128xf32> to vector<8x128xf32>
      %98 = arith.addf %97, %71 : vector<8x128xf32>
      %c0_59 = arith.constant 0 : index
      %c4_60 = arith.constant 4 : index
      %c0_61 = arith.constant 0 : index
      %c0_62 = arith.constant 0 : index
      %99 = vector.load %arg6[%c0_59, %c4_60, %c0_61, %c0_62] : memref<1x5x8x128xf32, #tpu.memory_space<vmem>>, vector<1x1x8x128xf32>
      %100 = vector.shape_cast %99 : vector<1x1x8x128xf32> to vector<8x128xf32>
      %101 = vector.shape_cast %98 : vector<8x128xf32> to vector<1x1x8x128xf32>
      tpu.vector_store %arg6[%c0_59, %c4_60, %c0_61, %c0_62], %101 {strides = array<i32>} : memref<1x5x8x128xf32, #tpu.memory_space<vmem>>, vector<1x1x8x128xf32>,
    } else {
    }
    %c16_i32_4 = arith.constant 16 : i32
    %12 = arith.cmpi sgt, %8, %c16_i32_4 : i32
    %13 = arith.extui %12 : i1 to i32
    %c0_i32_5 = arith.constant 0 : i32
    %14 = arith.cmpi ne, %13, %c0_i32_5 : i32
    scf.if %14 {
      %c0_i32_6 = arith.constant 0 : i32
      %c32_i32_7 = arith.constant 32 : i32
      %15 = arith.muli %c0_i32_6, %c32_i32_7 : i32
      %16 = tpu.assume_multiple %15, 32 : i32
      %17 = arith.index_cast %16 : i32 to index
      %c0 = arith.constant 0 : index
      %18 = vector.load %arg2[%17, %c0] : memref<32x128xf32, #tpu.memory_space<vmem>>, vector<32x128xf32>
      %19 = arith.index_cast %16 : i32 to index
      %c0_8 = arith.constant 0 : index
      %20 = vector.load %arg3[%19, %c0_8] : memref<32x128xf32, #tpu.memory_space<vmem>>, vector<32x128xf32>
      %21 = arith.index_cast %16 : i32 to index
      %c0_9 = arith.constant 0 : index
      %22 = vector.load %arg5[%21, %c0_9] : memref<32x128xf32, #tpu.memory_space<vmem>>, vector<32x128xf32>
      %23 = arith.index_cast %16 : i32 to index
      %c0_10 = arith.constant 0 : index
      %24 = vector.load %arg4[%23, %c0_10] : memref<32x128xi8, #tpu.memory_space<vmem>>, vector<32x128xi8>
      %25 = arith.sitofp %24 : vector<32x128xi8> to vector<32x128xf32>
      %cst_11 = arith.constant 5.000000e-01 : f32
      %26 = vector.broadcast %cst_11 : f32 to vector<32x128xf32>
      %27 = arith.cmpf ogt, %18, %26 : vector<32x128xf32>
      %cst_12 = arith.constant 1.000000e+00 : f32
      %cst_13 = arith.constant 0.000000e+00 : f32
      %28 = vector.broadcast %cst_12 : f32 to vector<32x128xf32>
      %29 = vector.broadcast %cst_13 : f32 to vector<32x128xf32>
      %30 = arith.select %27, %28, %29 : vector<32x128xi1>, vector<32x128xf32>
      %cst_14 = arith.constant 0.000000e+00 : f32
      %31 = vector.broadcast %cst_14 : f32 to vector<32x128xf32>
      %32 = arith.select %27, %20, %31 : vector<32x128xi1>, vector<32x128xf32>
      %33 = arith.subf %32, %22 : vector<32x128xf32>
      %34 = arith.mulf %33, %33 : vector<32x128xf32>
      %cst_15 = arith.constant 1.000000e+00 : f32
      %35 = vector.broadcast %cst_15 : f32 to vector<32x128xf32>
      %36 = arith.subf %35, %18 : vector<32x128xf32>
      %cst_16 = arith.constant 9.99999993E-9 : f32
      %37 = vector.broadcast %cst_16 : f32 to vector<32x128xf32>
      %38 = arith.addf %36, %37 : vector<32x128xf32>
      %cst_17 = arith.constant 9.99999993E-9 : f32
      %39 = vector.broadcast %cst_17 : f32 to vector<32x128xf32>
      %40 = arith.addf %18, %39 : vector<32x128xf32>
      %41 = math.log %38 : vector<32x128xf32>
      %cst_18 = arith.constant 2.000000e+00 : f32
      %42 = math.log %cst_18 : f32
      %43 = vector.broadcast %42 : f32 to vector<32x128xf32>
      %44 = arith.divf %41, %43 : vector<32x128xf32>
      %45 = math.log %40 : vector<32x128xf32>
      %cst_19 = arith.constant 2.000000e+00 : f32
      %46 = math.log %cst_19 : f32
      %47 = vector.broadcast %46 : f32 to vector<32x128xf32>
      %48 = arith.divf %45, %47 : vector<32x128xf32>
      %49 = arith.mulf %38, %38 : vector<32x128xf32>
      %50 = arith.mulf %40, %40 : vector<32x128xf32>
      %cst_20 = arith.constant 5.000000e-01 : f32
      %51 = vector.broadcast %cst_20 : f32 to vector<32x128xf32>
      %52 = arith.cmpf ogt, %25, %51 : vector<32x128xf32>
      %53 = arith.mulf %49, %48 : vector<32x128xf32>
      %54 = arith.mulf %50, %44 : vector<32x128xf32>
      %55 = arith.select %52, %53, %54 : vector<32x128xi1>, vector<32x128xf32>
      %56 = arith.mulf %30, %25 : vector<32x128xf32>
      %57 = tpu.iota {dimensions = array<i32: 0>} : vector<32x128xi32>
      %58 = tpu.iota {dimensions = array<i32: 1>} : vector<32x128xi32>
      %59 = arith.addi %2, %16 : i32
      %60 = vector.broadcast %59 : i32 to vector<32x128xi32>
      %61 = arith.addi %60, %57 : vector<32x128xi32>
      %c16_i32_21 = arith.constant 16 : i32
      %62 = vector.broadcast %c16_i32_21 : i32 to vector<32x128xi32>
      %63 = arith.cmpi slt, %61, %62 : vector<32x128xi32>
      %c16_i32_22 = arith.constant 16 : i32
      %64 = vector.broadcast %c16_i32_22 : i32 to vector<32x128xi32>
      %65 = arith.cmpi eq, %61, %64 : vector<32x128xi32>
      %c0_i32_23 = arith.constant 0 : i32
      %66 = vector.broadcast %c0_i32_23 : i32 to vector<32x128xi32>
      %67 = arith.cmpi slt, %58, %66 : vector<32x128xi32>
      %68 = arith.andi %65, %67 : vector<32x128xi1>
      %69 = arith.ori %63, %68 : vector<32x128xi1>
      %cst_24 = arith.constant 0.000000e+00 : f32
      %70 = vector.broadcast %cst_24 : f32 to vector<32x128xf32>
      %71 = arith.select %69, %55, %70 : vector<32x128xi1>, vector<32x128xf32>
      %cst_25 = arith.constant 0.000000e+00 : f32
      %72 = vector.broadcast %cst_25 : f32 to vector<32x128xf32>
      %73 = arith.select %69, %34, %72 : vector<32x128xi1>, vector<32x128xf32>
      %cst_26 = arith.constant 0.000000e+00 : f32
      %74 = vector.broadcast %cst_26 : f32 to vector<32x128xf32>
      %75 = arith.select %69, %30, %74 : vector<32x128xi1>, vector<32x128xf32>
      %cst_27 = arith.constant 0.000000e+00 : f32
      %76 = vector.broadcast %cst_27 : f32 to vector<32x128xf32>
      %77 = arith.select %69, %25, %76 : vector<32x128xi1>, vector<32x128xf32>
      %cst_28 = arith.constant 0.000000e+00 : f32
      %78 = vector.broadcast %cst_28 : f32 to vector<32x128xf32>
      %79 = arith.select %69, %56, %78 : vector<32x128xi1>, vector<32x128xf32>
      %80 = vector.shape_cast %71 : vector<32x128xf32> to vector<4x8x128xf32>
      %cst_29 = arith.constant dense<0.000000e+00> : vector<8x128xf32>
      %81 = vector.multi_reduction <add>, %80, %cst_29 [0] : vector<4x8x128xf32> to vector<8x128xf32>
      %82 = arith.addf %6, %81 : vector<8x128xf32>
      %83 = vector.shape_cast %73 : vector<32x128xf32> to vector<4x8x128xf32>
      %cst_30 = arith.constant dense<0.000000e+00> : vector<8x128xf32>
      %84 = vector.multi_reduction <add>, %83, %cst_30 [0] : vector<4x8x128xf32> to vector<8x128xf32>
      %85 = arith.addf %6, %84 : vector<8x128xf32>
      %86 = vector.shape_cast %75 : vector<32x128xf32> to vector<4x8x128xf32>
      %cst_31 = arith.constant dense<0.000000e+00> : vector<8x128xf32>
      %87 = vector.multi_reduction <add>, %86, %cst_31 [0] : vector<4x8x128xf32> to vector<8x128xf32>
      %88 = arith.addf %6, %87 : vector<8x128xf32>
      %89 = vector.shape_cast %77 : vector<32x128xf32> to vector<4x8x128xf32>
      %cst_32 = arith.constant dense<0.000000e+00> : vector<8x128xf32>
      %90 = vector.multi_reduction <add>, %89, %cst_32 [0] : vector<4x8x128xf32> to vector<8x128xf32>
      %91 = arith.addf %6, %90 : vector<8x128xf32>
      %92 = vector.shape_cast %79 : vector<32x128xf32> to vector<4x8x128xf32>
      %cst_33 = arith.constant dense<0.000000e+00> : vector<8x128xf32>
      %93 = vector.multi_reduction <add>, %92, %cst_33 [0] : vector<4x8x128xf32> to vector<8x128xf32>
      %94 = arith.addf %6, %93 : vector<8x128xf32>
      %c1_i32_34 = arith.constant 1 : i32
      %c0_35 = arith.constant 0 : index
      %c0_36 = arith.constant 0 : index
      %c0_37 = arith.constant 0 : index
      %c0_38 = arith.constant 0 : index
      %95 = vector.load %arg6[%c0_35, %c0_36, %c0_37, %c0_38] : memref<1x5x8x128xf32, #tpu.memory_space<vmem>>, vector<1x1x8x128xf32>
      %96 = vector.shape_cast %95 : vector<1x1x8x128xf32> to vector<8x128xf32>
      %97 = arith.addf %96, %82 : vector<8x128xf32>
      %c0_39 = arith.constant 0 : index
      %c0_40 = arith.constant 0 : index
      %c0_41 = arith.constant 0 : index
      %c0_42 = arith.constant 0 : index
      %98 = vector.load %arg6[%c0_39, %c0_40, %c0_41, %c0_42] : memref<1x5x8x128xf32, #tpu.memory_space<vmem>>, vector<1x1x8x128xf32>
      %99 = vector.shape_cast %98 : vector<1x1x8x128xf32> to vector<8x128xf32>
      %100 = vector.shape_cast %97 : vector<8x128xf32> to vector<1x1x8x128xf32>
      tpu.vector_store %arg6[%c0_39, %c0_40, %c0_41, %c0_42], %100 {strides = array<i32>} : memref<1x5x8x128xf32, #tpu.memory_space<vmem>>, vector<1x1x8x128xf32>,
      %c0_43 = arith.constant 0 : index
      %c1 = arith.constant 1 : index
      %c0_44 = arith.constant 0 : index
      %c0_45 = arith.constant 0 : index
      %101 = vector.load %arg6[%c0_43, %c1, %c0_44, %c0_45] : memref<1x5x8x128xf32, #tpu.memory_space<vmem>>, vector<1x1x8x128xf32>
      %102 = vector.shape_cast %101 : vector<1x1x8x128xf32> to vector<8x128xf32>
      %103 = arith.addf %102, %85 : vector<8x128xf32>
      %c0_46 = arith.constant 0 : index
      %c1_47 = arith.constant 1 : index
      %c0_48 = arith.constant 0 : index
      %c0_49 = arith.constant 0 : index
      %104 = vector.load %arg6[%c0_46, %c1_47, %c0_48, %c0_49] : memref<1x5x8x128xf32, #tpu.memory_space<vmem>>, vector<1x1x8x128xf32>
      %105 = vector.shape_cast %104 : vector<1x1x8x128xf32> to vector<8x128xf32>
      %106 = vector.shape_cast %103 : vector<8x128xf32> to vector<1x1x8x128xf32>
      tpu.vector_store %arg6[%c0_46, %c1_47, %c0_48, %c0_49], %106 {strides = array<i32>} : memref<1x5x8x128xf32, #tpu.memory_space<vmem>>, vector<1x1x8x128xf32>,
      %c0_50 = arith.constant 0 : index
      %c2 = arith.constant 2 : index
      %c0_51 = arith.constant 0 : index
      %c0_52 = arith.constant 0 : index
      %107 = vector.load %arg6[%c0_50, %c2, %c0_51, %c0_52] : memref<1x5x8x128xf32, #tpu.memory_space<vmem>>, vector<1x1x8x128xf32>
      %108 = vector.shape_cast %107 : vector<1x1x8x128xf32> to vector<8x128xf32>
      %109 = arith.addf %108, %88 : vector<8x128xf32>
      %c0_53 = arith.constant 0 : index
      %c2_54 = arith.constant 2 : index
      %c0_55 = arith.constant 0 : index
      %c0_56 = arith.constant 0 : index
      %110 = vector.load %arg6[%c0_53, %c2_54, %c0_55, %c0_56] : memref<1x5x8x128xf32, #tpu.memory_space<vmem>>, vector<1x1x8x128xf32>
      %111 = vector.shape_cast %110 : vector<1x1x8x128xf32> to vector<8x128xf32>
      %112 = vector.shape_cast %109 : vector<8x128xf32> to vector<1x1x8x128xf32>
      tpu.vector_store %arg6[%c0_53, %c2_54, %c0_55, %c0_56], %112 {strides = array<i32>} : memref<1x5x8x128xf32, #tpu.memory_space<vmem>>, vector<1x1x8x128xf32>,
      %c0_57 = arith.constant 0 : index
      %c3 = arith.constant 3 : index
      %c0_58 = arith.constant 0 : index
      %c0_59 = arith.constant 0 : index
      %113 = vector.load %arg6[%c0_57, %c3, %c0_58, %c0_59] : memref<1x5x8x128xf32, #tpu.memory_space<vmem>>, vector<1x1x8x128xf32>
      %114 = vector.shape_cast %113 : vector<1x1x8x128xf32> to vector<8x128xf32>
      %115 = arith.addf %114, %91 : vector<8x128xf32>
      %c0_60 = arith.constant 0 : index
      %c3_61 = arith.constant 3 : index
      %c0_62 = arith.constant 0 : index
      %c0_63 = arith.constant 0 : index
      %116 = vector.load %arg6[%c0_60, %c3_61, %c0_62, %c0_63] : memref<1x5x8x128xf32, #tpu.memory_space<vmem>>, vector<1x1x8x128xf32>
      %117 = vector.shape_cast %116 : vector<1x1x8x128xf32> to vector<8x128xf32>
      %118 = vector.shape_cast %115 : vector<8x128xf32> to vector<1x1x8x128xf32>
      tpu.vector_store %arg6[%c0_60, %c3_61, %c0_62, %c0_63], %118 {strides = array<i32>} : memref<1x5x8x128xf32, #tpu.memory_space<vmem>>, vector<1x1x8x128xf32>,
      %c0_64 = arith.constant 0 : index
      %c4 = arith.constant 4 : index
      %c0_65 = arith.constant 0 : index
      %c0_66 = arith.constant 0 : index
      %119 = vector.load %arg6[%c0_64, %c4, %c0_65, %c0_66] : memref<1x5x8x128xf32, #tpu.memory_space<vmem>>, vector<1x1x8x128xf32>
      %120 = vector.shape_cast %119 : vector<1x1x8x128xf32> to vector<8x128xf32>
      %121 = arith.addf %120, %94 : vector<8x128xf32>
      %c0_67 = arith.constant 0 : index
      %c4_68 = arith.constant 4 : index
      %c0_69 = arith.constant 0 : index
      %c0_70 = arith.constant 0 : index
      %122 = vector.load %arg6[%c0_67, %c4_68, %c0_69, %c0_70] : memref<1x5x8x128xf32, #tpu.memory_space<vmem>>, vector<1x1x8x128xf32>
      %123 = vector.shape_cast %122 : vector<1x1x8x128xf32> to vector<8x128xf32>
      %124 = vector.shape_cast %121 : vector<8x128xf32> to vector<1x1x8x128xf32>
      tpu.vector_store %arg6[%c0_67, %c4_68, %c0_69, %c0_70], %124 {strides = array<i32>} : memref<1x5x8x128xf32, #tpu.memory_space<vmem>>, vector<1x1x8x128xf32>,
    } else {
    }
    return
  }
  func.func @transform_0(%arg0: i32, %arg1: i32) -> (i32, i32) {
    %c1_i32 = arith.constant 1 : i32
    %0 = arith.muli %arg0, %c1_i32 : i32
    %1 = arith.addi %0, %arg1 : i32
    %c0_i32 = arith.constant 0 : i32
    %2 = arith.minsi %1, %c0_i32 : i32
    %c0_i32_0 = arith.constant 0 : i32
    %c0_i32_1 = arith.constant 0 : i32
    return %2, %c0_i32_0 : i32, i32
  }
  func.func @transform_1(%arg0: i32, %arg1: i32) -> (i32, i32) {
    %c1_i32 = arith.constant 1 : i32
    %0 = arith.muli %arg0, %c1_i32 : i32
    %1 = arith.addi %0, %arg1 : i32
    %c0_i32 = arith.constant 0 : i32
    %2 = arith.minsi %1, %c0_i32 : i32
    %c0_i32_0 = arith.constant 0 : i32
    %c0_i32_1 = arith.constant 0 : i32
    return %2, %c0_i32_0 : i32, i32
  }
  func.func @transform_2(%arg0: i32, %arg1: i32) -> (i32, i32) {
    %c1_i32 = arith.constant 1 : i32
    %0 = arith.muli %arg0, %c1_i32 : i32
    %1 = arith.addi %0, %arg1 : i32
    %c0_i32 = arith.constant 0 : i32
    %2 = arith.minsi %1, %c0_i32 : i32
    %c0_i32_0 = arith.constant 0 : i32
    %c0_i32_1 = arith.constant 0 : i32
    return %2, %c0_i32_0 : i32, i32
  }
  func.func @transform_3(%arg0: i32, %arg1: i32) -> (i32, i32) {
    %c1_i32 = arith.constant 1 : i32
    %0 = arith.muli %arg0, %c1_i32 : i32
    %1 = arith.addi %0, %arg1 : i32
    %c0_i32 = arith.constant 0 : i32
    %2 = arith.minsi %1, %c0_i32 : i32
    %c0_i32_0 = arith.constant 0 : i32
    %c0_i32_1 = arith.constant 0 : i32
    return %2, %c0_i32_0 : i32, i32
  }
  func.func @transform_4(%arg0: i32, %arg1: i32) -> (i32, i32, i32, i32) {
    %c0_i32 = arith.constant 0 : i32
    %c0_i32_0 = arith.constant 0 : i32
    %c0_i32_1 = arith.constant 0 : i32
    %c0_i32_2 = arith.constant 0 : i32
    return %arg0, %c0_i32, %c0_i32_0, %c0_i32_1 : i32, i32, i32, i32
  }
}

</mosaic_0001>

<llo_original>
// kernel: tpu_custom_call.1
$region0: #{tpu_custom_call.1}
  #allocation0 [shape = 'u32[]', space=smem, size = 0x4, offset = 0x4, fixed_abs, tag = 'smem constant byte address 0x4 - core index']
  #allocation1 [shape = 'u32[144,128]{1,0:T(1,128)}', space=vmem, size = 0x12000, scoped, tag = 'internal scratch']
  %s0 = inlined_call_operand.hbm [shape: f32[16,128], index: 0, kind: input, shape index: {}]
  %s1 = inlined_call_operand.hbm [shape: f32[16,128], index: 1, kind: input, shape index: {}]
  %s2 = inlined_call_operand.hbm [shape: s8[32,128], index: 2, kind: input, shape index: {}]
  %s3 = inlined_call_operand.hbm [shape: f32[16,128], index: 3, kind: input, shape index: {}]
  %s4 = inlined_call_operand.hbm [shape: f32[1,5,8,128], index: 4, kind: output, shape index: {}]
  %s5 = sld [smem:[#allocation0]]
  $region54: #{tpu_custom_call.1} parent=0
    _
  %s7 = ssub.s32 1, %s5
  %s8 = scalar_select 0, %s7, %s5
  $region1: #{tpu_custom_call.1} parent=0
    #allocation2 [shape = 'u8[16384]{0}', space=vmem, size = 0x4000, scoped, tag = 'input window, operand 0, single buffered']
    #allocation3 [shape = 's32[1]{0}', space=sflag, size = 0x4, scoped, tag = 'scoped memory for tpu_custom_call.1']
    #allocation4 [shape = 's32[1]{0}', space=sflag, size = 0x4, scoped, tag = 'scoped memory for tpu_custom_call.1']
    #allocation5 [shape = 'u8[16384]{0}', space=vmem, size = 0x4000, scoped, tag = 'input window, operand 1, single buffered']
    #allocation6 [shape = 's32[1]{0}', space=sflag, size = 0x4, scoped, tag = 'scoped memory for tpu_custom_call.1']
    #allocation7 [shape = 'u8[4096]{0}', space=vmem, size = 0x1000, scoped, tag = 'input window, operand 2, single buffered']
    #allocation8 [shape = 'u8[16384]{0}', space=vmem, size = 0x4000, scoped, tag = 'input window, operand 3, single buffered']
    #allocation9 [shape = 's32[1]{0}', space=sflag, size = 0x4, scoped, tag = 'scoped memory for tpu_custom_call.1']
    #allocation10 [shape = 'u8[20480]{0}', space=vmem, size = 0x5000, scoped, tag = 'output window, operand 0, single buffered']
    %9 = vsyncpa [#allocation3], 0
    %10 = vsyncpa [#allocation6], 0
    %11 = vsyncpa [#allocation9], 0
    %12 = vsyncpa [#allocation4], 0
    // Predicated region
    $region2: #{tpu_custom_call.1} parent=1 // pred_check
      _
    $region3: #{tpu_custom_call.1} parent=1 // pred_check_branch
      %14 = sbr.rel (0) target = $region5
    $region4: #{tpu_custom_call.1} parent=1 // pred_region
      %s15 = sadd.s32 0, 0
      %p16 = scmp.lt.s32.totalorder %s15, 0
      %s17 = scalar_select %p16, %s15, 0
      %s18 = smul.u32 4, %s17
      %s19 = ssub.s32 2, %s18
      %s20 = smul.u32 128, %s19
      %s22 = ssub.s32 512, %s20
      %23 = vsyncadd [#allocation3], %s22
      %p24 = scmp.ne.s32.totalorder 0, %s20
      %s25 = smul.addr %s18, 128
      %s26 = scalar_lea.hbm %s0, %s25
      %s27 = smul.u32 8, %s19
      %s28 = sshll.u32 [#allocation2], 4
      %s29 = int_to_ptr.vmem [resolvable:$true] %s28
      %s30 = sshll.u32 %s27, 4
      %34 = dma.hbm_to_vmem [thread:$0]  (%p24), %s26, %s30, %s29, [#allocation3], 128, 128, 8
    $region5: #{tpu_custom_call.1} parent=1 // pred_fallthru
      _
    // Predicated region
    $region6: #{tpu_custom_call.1} parent=1 // pred_check
      _
    $region7: #{tpu_custom_call.1} parent=1 // pred_check_branch
      %36 = sbr.rel (0) target = $region9
    $region8: #{tpu_custom_call.1} parent=1 // pred_region
      %s37 = sadd.s32 0, 0
      %p38 = scmp.lt.s32.totalorder %s37, 0
      %s39 = scalar_select %p38, %s37, 0
      %s40 = smul.u32 4, %s39
      %s41 = ssub.s32 2, %s40
      %s42 = smul.u32 128, %s41
      %s44 = ssub.s32 512, %s42
      %45 = vsyncadd [#allocation6], %s44
      %p46 = scmp.ne.s32.totalorder 0, %s42
      %s47 = smul.addr %s40, 128
      %s48 = scalar_lea.hbm %s1, %s47
      %s49 = smul.u32 8, %s41
      %s50 = sshll.u32 [#allocation5], 4
      %s51 = int_to_ptr.vmem [resolvable:$true] %s50
      %s52 = sshll.u32 %s49, 4
      %56 = dma.hbm_to_vmem [thread:$0]  (%p46), %s48, %s52, %s51, [#allocation6], 128, 128, 8
    $region9: #{tpu_custom_call.1} parent=1 // pred_fallthru
      _
    // Predicated region
    $region10: #{tpu_custom_call.1} parent=1 // pred_check
      _
    $region11: #{tpu_custom_call.1} parent=1 // pred_check_branch
      %58 = sbr.rel (0) target = $region13
    $region12: #{tpu_custom_call.1} parent=1 // pred_region
      %s59 = sadd.s32 0, 0
      %p60 = scmp.lt.s32.totalorder %s59, 0
      %s61 = scalar_select %p60, %s59, 0
      %s63 = ssub.s32 128, 128
      %64 = vsyncadd [#allocation6], %s63
      %s65 = smul.addr %s61, 128
      %s66 = scalar_lea.hbm %s2, %s65
      %s68 = sshll.u32 [#allocation7], 4
      %s69 = int_to_ptr.vmem [resolvable:$true] %s68
      %71 = dma.hbm_to_vmem [thread:$0]  %s66, 128, %s69, [#allocation6]
    $region13: #{tpu_custom_call.1} parent=1 // pred_fallthru
      _
    // Predicated region
    $region14: #{tpu_custom_call.1} parent=1 // pred_check
      _
    $region15: #{tpu_custom_call.1} parent=1 // pred_check_branch
      %73 = sbr.rel (0) target = $region17
    $region16: #{tpu_custom_call.1} parent=1 // pred_region
      %s74 = sadd.s32 0, 0
      %p75 = scmp.lt.s32.totalorder %s74, 0
      %s76 = scalar_select %p75, %s74, 0
      %s77 = smul.u32 4, %s76
      %s78 = ssub.s32 2, %s77
      %s79 = smul.u32 128, %s78
      %s81 = ssub.s32 512, %s79
      %82 = vsyncadd [#allocation9], %s81
      %p83 = scmp.ne.s32.totalorder 0, %s79
      %s84 = smul.addr %s77, 128
      %s85 = scalar_lea.hbm %s3, %s84
      %s86 = smul.u32 8, %s78
      %s87 = sshll.u32 [#allocation8], 4
      %s88 = int_to_ptr.vmem [resolvable:$true] %s87
      %s89 = sshll.u32 %s86, 4
      %93 = dma.hbm_to_vmem [thread:$0]  (%p83), %s85, %s89, %s88, [#allocation9], 128, 128, 8
    $region17: #{tpu_custom_call.1} parent=1 // pred_fallthru
      _
    // Predicated region
    $region18: #{tpu_custom_call.1} parent=1 // pred_check
      _
    $region19: #{tpu_custom_call.1} parent=1 // pred_check_branch
      %95 = sbr.rel (0) target = $region21
    $region20: #{tpu_custom_call.1} parent=1 // pred_region
      %96 = dma.done [#allocation3], 512
    $region21: #{tpu_custom_call.1} parent=1 // pred_fallthru
      _
    // Predicated region
    $region22: #{tpu_custom_call.1} parent=1 // pred_check
      _
    $region23: #{tpu_custom_call.1} parent=1 // pred_check_branch
      %98 = sbr.rel (0) target = $region25
    $region24: #{tpu_custom_call.1} parent=1 // pred_region
      %99 = dma.done [#allocation6], 512
    $region25: #{tpu_custom_call.1} parent=1 // pred_fallthru
      _
    // Predicated region
    $region26: #{tpu_custom_call.1} parent=1 // pred_check
      _
    $region27: #{tpu_custom_call.1} parent=1 // pred_check_branch
      %101 = sbr.rel (0) target = $region29
    $region28: #{tpu_custom_call.1} parent=1 // pred_region
      %102 = dma.done [#allocation6], 128
    $region29: #{tpu_custom_call.1} parent=1 // pred_fallthru
      _
    // Predicated region
    $region30: #{tpu_custom_call.1} parent=1 // pred_check
      _
    $region31: #{tpu_custom_call.1} parent=1 // pred_check_branch
      %104 = sbr.rel (0) target = $region33
    $region32: #{tpu_custom_call.1} parent=1 // pred_region
      %105 = dma.done [#allocation9], 512
    $region33: #{tpu_custom_call.1} parent=1 // pred_fallthru
      _
    %s106 = sadd.s32 0, 0
    %p107 = scmp.lt.s32.totalorder %s106, 0
    %s108 = scalar_select %p107, %s106, 0
    %s109 = smul.u32 4, %s108
    %s110 = ssub.s32 2, %s109
    %s111 = smul.u32 128, %s110
    %s112 = sadd.s32 0, 0
    %p113 = scmp.lt.s32.totalorder %s112, 0
    %s114 = scalar_select %p113, %s112, 0
    %s115 = smul.u32 4, %s114
    %s116 = ssub.s32 2, %s115
    %s117 = smul.u32 128, %s116
    %s118 = sadd.s32 0, 0
    %p119 = scmp.lt.s32.totalorder %s118, 0
    %s120 = scalar_select %p119, %s118, 0
    %s121 = sadd.s32 0, 0
    %p122 = scmp.lt.s32.totalorder %s121, 0
    %s123 = scalar_select %p122, %s121, 0
    %s124 = smul.u32 4, %s123
    %s125 = ssub.s32 2, %s124
    %s126 = smul.u32 128, %s125
    %s127 = sadd.s32 0, 0
    %s128 = smul.u32 %s127, 32
    %p129 = scmp.eq.s32.totalorder 0, 0
    // Predicated region
    $region34: #{tpu_custom_call.1} parent=1 // pred_check
      %p130 = pneg %p129
    $region35: #{tpu_custom_call.1} parent=1 // pred_check_branch
      %132 = sbr.rel (%p130) target = $region37
    $region36: #{tpu_custom_call.1} parent=1 // pred_region
      %133 = vst [vmem:[#allocation10] sm:$0xff] 0.0
      %134 = vst [vmem:[#allocation10 + $0x8] sm:$0xff] 0.0
      %135 = vst [vmem:[#allocation10 + $0x10] sm:$0xff] 0.0
      %136 = vst [vmem:[#allocation10 + $0x18] sm:$0xff] 0.0
      %137 = vst [vmem:[#allocation10 + $0x20] sm:$0xff] 0.0
    $region37: #{tpu_custom_call.1} parent=1 // pred_fallthru
      _
    %s138 = sadd.s32 %s127, 1
    %s139 = smul.u32 %s138, 32
    %p140 = scmp.le.s32.totalorder %s139, 16
    // Predicated region
    $region38: #{tpu_custom_call.1} parent=1 // pred_check
      %p141 = pneg %p140
    $region39: #{tpu_custom_call.1} parent=1 // pred_check_branch
      %143 = sbr.rel (%p141) target = $region41
    $region40: #{tpu_custom_call.1} parent=1 // pred_region
      %v144 = vld [vmem:[#allocation2] sm:$0xff]
      %v145 = vld [vmem:[#allocation2 + $0x8] sm:$0xff]
      %v146 = vld [vmem:[#allocation2 + $0x10] sm:$0xff]
      %v147 = vld [vmem:[#allocation2 + $0x18] sm:$0xff]
      %v148 = vld [vmem:[#allocation5] sm:$0xff]
      %v149 = vld [vmem:[#allocation5 + $0x8] sm:$0xff]
      %v150 = vld [vmem:[#allocation5 + $0x10] sm:$0xff]
      %v151 = vld [vmem:[#allocation5 + $0x18] sm:$0xff]
      %v152 = vld [vmem:[#allocation8] sm:$0xff]
      %v153 = vld [vmem:[#allocation8 + $0x8] sm:$0xff]
      %v154 = vld [vmem:[#allocation8 + $0x10] sm:$0xff]
      %v155 = vld [vmem:[#allocation8 + $0x18] sm:$0xff]
      %v156 = vld [vmem:[#allocation7] sm:$0xff]
      %v157 = vunpack.c.0.s8 %v156
      %v158 = vunpack.c.1.s8 %v156
      %v159 = vunpack.c.2.s8 %v156
      %v160 = vunpack.c.3.s8 %v156
      %v161 = vcvt.s32.f32 %v157
      %v162 = vcvt.s32.f32 %v158
      %v163 = vcvt.s32.f32 %v159
      %v164 = vcvt.s32.f32 %v160
      %vm165 = vcmp.gt.f32.partialorder %v144, 0.5
      %vm166 = vcmp.gt.f32.partialorder %v145, 0.5
      %vm167 = vcmp.gt.f32.partialorder %v146, 0.5
      %vm168 = vcmp.gt.f32.partialorder %v147, 0.5
      %v169 = vsel %vm165, 1.0, 0.0
      %v170 = vsel %vm166, 1.0, 0.0
      %v171 = vsel %vm167, 1.0, 0.0
      %v172 = vsel %vm168, 1.0, 0.0
      %v173 = vsel %vm165, %v148, 0.0
      %v174 = vsel %vm166, %v149, 0.0
      %v175 = vsel %vm167, %v150, 0.0
      %v176 = vsel %vm168, %v151, 0.0
      %v177 = vsub.f32 %v173, %v152
      %v178 = vsub.f32 %v174, %v153
      %v179 = vsub.f32 %v175, %v154
      %v180 = vsub.f32 %v176, %v155
      %v181 = vmul.f32 %v177, %v177
      %v182 = vmul.f32 %v178, %v178
      %v183 = vmul.f32 %v179, %v179
      %v184 = vmul.f32 %v180, %v180
      %v185 = vsub.f32 1.0, %v144
      %v186 = vsub.f32 1.0, %v145
      %v187 = vsub.f32 1.0, %v146
      %v188 = vsub.f32 1.0, %v147
      %v189 = vadd.f32 %v185, 1e-08
      %v190 = vadd.f32 %v186, 1e-08
      %v191 = vadd.f32 %v187, 1e-08
      %v192 = vadd.f32 %v188, 1e-08
      %v193 = vadd.f32 %v144, 1e-08
      %v194 = vadd.f32 %v145, 1e-08
      %v195 = vadd.f32 %v146, 1e-08
      %v196 = vadd.f32 %v147, 1e-08
      %v197 = vlog2.pop %v189
      %v198 = vmul.f32 %v197, 0.6931472
      %v199 = vlog2.pop %v190
      %v200 = vmul.f32 %v199, 0.6931472
      %v201 = vlog2.pop %v191
      %v202 = vmul.f32 %v201, 0.6931472
      %v203 = vlog2.pop %v192
      %v204 = vmul.f32 %v203, 0.6931472
      %v205 = vrcp.pop 0.6931472
      %v206 = vmul.f32 %v198, %v205
      %v207 = vmul.f32 %v200, %v205
      %v208 = vmul.f32 %v202, %v205
      %v209 = vmul.f32 %v204, %v205
      %v210 = vlog2.pop %v193
      %v211 = vmul.f32 %v210, 0.6931472
      %v212 = vlog2.pop %v194
      %v213 = vmul.f32 %v212, 0.6931472
      %v214 = vlog2.pop %v195
      %v215 = vmul.f32 %v214, 0.6931472
      %v216 = vlog2.pop %v196
      %v217 = vmul.f32 %v216, 0.6931472
      %v218 = vmul.f32 %v211, %v205
      %v219 = vmul.f32 %v213, %v205
      %v220 = vmul.f32 %v215, %v205
      %v221 = vmul.f32 %v217, %v205
      %v222 = vmul.f32 %v189, %v189
      %v223 = vmul.f32 %v190, %v190
      %v224 = vmul.f32 %v191, %v191
      %v225 = vmul.f32 %v192, %v192
      %v226 = vmul.f32 %v193, %v193
      %v227 = vmul.f32 %v194, %v194
      %v228 = vmul.f32 %v195, %v195
      %v229 = vmul.f32 %v196, %v196
      %vm230 = vcmp.gt.f32.partialorder %v161, 0.5
      %vm231 = vcmp.gt.f32.partialorder %v162, 0.5
      %vm232 = vcmp.gt.f32.partialorder %v163, 0.5
      %vm233 = vcmp.gt.f32.partialorder %v164, 0.5
      %v234 = vmul.f32 %v222, %v218
      %v235 = vmul.f32 %v223, %v219
      %v236 = vmul.f32 %v224, %v220
      %v237 = vmul.f32 %v225, %v221
      %v238 = vmul.f32 %v226, %v206
      %v239 = vmul.f32 %v227, %v207
      %v240 = vmul.f32 %v228, %v208
      %v241 = vmul.f32 %v229, %v209
      %v242 = vsel %vm230, %v234, %v238
      %v243 = vsel %vm231, %v235, %v239
      %v244 = vsel %vm232, %v236, %v240
      %v245 = vsel %vm233, %v237, %v241
      %v246 = vmul.f32 %v169, %v161
      %v247 = vmul.f32 %v170, %v162
      %v248 = vmul.f32 %v171, %v163
      %v249 = vmul.f32 %v172, %v164
      %v250 = vadd.f32 %v242, %v243
      %v251 = vadd.f32 %v250, %v244
      %v252 = vadd.f32 %v251, %v245
      %v253 = vadd.f32 %v252, 0.0
      %v254 = vadd.f32 %v181, %v182
      %v255 = vadd.f32 %v254, %v183
      %v256 = vadd.f32 %v255, %v184
      %v257 = vadd.f32 %v256, 0.0
      %v258 = vadd.f32 %v169, %v170
      %v259 = vadd.f32 %v258, %v171
      %v260 = vadd.f32 %v259, %v172
      %v261 = vadd.f32 %v260, 0.0
      %v262 = vadd.f32 %v161, %v162
      %v263 = vadd.f32 %v262, %v163
      %v264 = vadd.f32 %v263, %v164
      %v265 = vadd.f32 %v264, 0.0
      %v266 = vadd.f32 %v246, %v247
      %v267 = vadd.f32 %v266, %v248
      %v268 = vadd.f32 %v267, %v249
      %v269 = vadd.f32 %v268, 0.0
      %v270 = vld [vmem:[#allocation10] sm:$0xff]
      %v271 = vadd.f32 %v270, %v253
      %272 = vst [vmem:[#allocation10] sm:$0xff] %v271
      %s273 = scalar_lea.vmem [#allocation10], 8
      %v274 = vld [vmem:[%s273] sm:$0xff]
      %v275 = vadd.f32 %v274, %v257
      %276 = vst [vmem:[%s273] sm:$0xff] %v275
      %s277 = scalar_lea.vmem [#allocation10], 16
      %v278 = vld [vmem:[%s277] sm:$0xff]
      %v279 = vadd.f32 %v278, %v261
      %280 = vst [vmem:[%s277] sm:$0xff] %v279
      %s281 = scalar_lea.vmem [#allocation10], 24
      %v282 = vld [vmem:[%s281] sm:$0xff]
      %v283 = vadd.f32 %v282, %v265
      %284 = vst [vmem:[%s281] sm:$0xff] %v283
      %s285 = scalar_lea.vmem [#allocation10], 32
      %v286 = vld [vmem:[%s285] sm:$0xff]
      %v287 = vadd.f32 %v286, %v269
      %288 = vst [vmem:[%s285] sm:$0xff] %v287
    $region41: #{tpu_custom_call.1} parent=1 // pred_fallthru
      _
    %p289 = scmp.gt.s32.totalorder %s139, 16
    // Predicated region
    $region42: #{tpu_custom_call.1} parent=1 // pred_check
      %p290 = pneg %p289
    $region43: #{tpu_custom_call.1} parent=1 // pred_check_branch
      %292 = sbr.rel (%p290) target = $region45
    $region44: #{tpu_custom_call.1} parent=1 // pred_region
      %v293 = vld [vmem:[#allocation2] sm:$0xff]
      %v294 = vld [vmem:[#allocation2 + $0x8] sm:$0xff]
      %v295 = vld [vmem:[#allocation2 + $0x10] sm:$0xff]
      %v296 = vld [vmem:[#allocation2 + $0x18] sm:$0xff]
      %v297 = vld [vmem:[#allocation5] sm:$0xff]
      %v298 = vld [vmem:[#allocation5 + $0x8] sm:$0xff]
      %v299 = vld [vmem:[#allocation5 + $0x10] sm:$0xff]
      %v300 = vld [vmem:[#allocation5 + $0x18] sm:$0xff]
      %v301 = vld [vmem:[#allocation8] sm:$0xff]
      %v302 = vld [vmem:[#allocation8 + $0x8] sm:$0xff]
      %v303 = vld [vmem:[#allocation8 + $0x10] sm:$0xff]
      %v304 = vld [vmem:[#allocation8 + $0x18] sm:$0xff]
      %v305 = vld [vmem:[#allocation7] sm:$0xff]
      %v306 = vunpack.c.0.s8 %v305
      %v307 = vunpack.c.1.s8 %v305
      %v308 = vunpack.c.2.s8 %v305
      %v309 = vunpack.c.3.s8 %v305
      %v310 = vcvt.s32.f32 %v306
      %v311 = vcvt.s32.f32 %v307
      %v312 = vcvt.s32.f32 %v308
      %v313 = vcvt.s32.f32 %v309
      %vm314 = vcmp.gt.f32.partialorder %v293, 0.5
      %vm315 = vcmp.gt.f32.partialorder %v294, 0.5
      %vm316 = vcmp.gt.f32.partialorder %v295, 0.5
      %vm317 = vcmp.gt.f32.partialorder %v296, 0.5
      %v318 = vsel %vm314, 1.0, 0.0
      %v319 = vsel %vm315, 1.0, 0.0
      %v320 = vsel %vm316, 1.0, 0.0
      %v321 = vsel %vm317, 1.0, 0.0
      %v322 = vsel %vm314, %v297, 0.0
      %v323 = vsel %vm315, %v298, 0.0
      %v324 = vsel %vm316, %v299, 0.0
      %v325 = vsel %vm317, %v300, 0.0
      %v326 = vsub.f32 %v322, %v301
      %v327 = vsub.f32 %v323, %v302
      %v328 = vsub.f32 %v324, %v303
      %v329 = vsub.f32 %v325, %v304
      %v330 = vmul.f32 %v326, %v326
      %v331 = vmul.f32 %v327, %v327
      %v332 = vmul.f32 %v328, %v328
      %v333 = vmul.f32 %v329, %v329
      %v334 = vsub.f32 1.0, %v293
      %v335 = vsub.f32 1.0, %v294
      %v336 = vsub.f32 1.0, %v295
      %v337 = vsub.f32 1.0, %v296
      %v338 = vadd.f32 %v334, 1e-08
      %v339 = vadd.f32 %v335, 1e-08
      %v340 = vadd.f32 %v336, 1e-08
      %v341 = vadd.f32 %v337, 1e-08
      %v342 = vadd.f32 %v293, 1e-08
      %v343 = vadd.f32 %v294, 1e-08
      %v344 = vadd.f32 %v295, 1e-08
      %v345 = vadd.f32 %v296, 1e-08
      %v346 = vlog2.pop %v338
      %v347 = vmul.f32 %v346, 0.6931472
      %v348 = vlog2.pop %v339
      %v349 = vmul.f32 %v348, 0.6931472
      %v350 = vlog2.pop %v340
      %v351 = vmul.f32 %v350, 0.6931472
      %v352 = vlog2.pop %v341
      %v353 = vmul.f32 %v352, 0.6931472
      %v354 = vrcp.pop 0.6931472
      %v355 = vmul.f32 %v347, %v354
      %v356 = vmul.f32 %v349, %v354
      %v357 = vmul.f32 %v351, %v354
      %v358 = vmul.f32 %v353, %v354
      %v359 = vlog2.pop %v342
      %v360 = vmul.f32 %v359, 0.6931472
      %v361 = vlog2.pop %v343
      %v362 = vmul.f32 %v361, 0.6931472
      %v363 = vlog2.pop %v344
      %v364 = vmul.f32 %v363, 0.6931472
      %v365 = vlog2.pop %v345
      %v366 = vmul.f32 %v365, 0.6931472
      %v367 = vmul.f32 %v360, %v354
      %v368 = vmul.f32 %v362, %v354
      %v369 = vmul.f32 %v364, %v354
      %v370 = vmul.f32 %v366, %v354
      %v371 = vmul.f32 %v338, %v338
      %v372 = vmul.f32 %v339, %v339
      %v373 = vmul.f32 %v340, %v340
      %v374 = vmul.f32 %v341, %v341
      %v375 = vmul.f32 %v342, %v342
      %v376 = vmul.f32 %v343, %v343
      %v377 = vmul.f32 %v344, %v344
      %v378 = vmul.f32 %v345, %v345
      %vm379 = vcmp.gt.f32.partialorder %v310, 0.5
      %vm380 = vcmp.gt.f32.partialorder %v311, 0.5
      %vm381 = vcmp.gt.f32.partialorder %v312, 0.5
      %vm382 = vcmp.gt.f32.partialorder %v313, 0.5
      %v383 = vmul.f32 %v371, %v367
      %v384 = vmul.f32 %v372, %v368
      %v385 = vmul.f32 %v373, %v369
      %v386 = vmul.f32 %v374, %v370
      %v387 = vmul.f32 %v375, %v355
      %v388 = vmul.f32 %v376, %v356
      %v389 = vmul.f32 %v377, %v357
      %v390 = vmul.f32 %v378, %v358
      %v391 = vsel %vm379, %v383, %v387
      %v392 = vsel %vm380, %v384, %v388
      %v393 = vsel %vm381, %v385, %v389
      %v394 = vsel %vm382, %v386, %v390
      %v395 = vmul.f32 %v318, %v310
      %v396 = vmul.f32 %v319, %v311
      %v397 = vmul.f32 %v320, %v312
      %v398 = vmul.f32 %v321, %v313
      %v399 = vlaneseq
      %v400 = vshrl.u32 %v399, 7
      %v401 = vadd.s32 %v400, 8
      %v402 = vadd.s32 %v400, 16
      %v403 = vadd.s32 %v400, 24
      %v404 = vlaneseq
      %v405 = vand.u32 %v404, 127
      %s406 = sadd.s32 %s128, 0
      %v407 = vstv %s406
      %v408 = vadd.s32 %v407, %v400
      %v409 = vadd.s32 %v407, %v401
      %v410 = vadd.s32 %v407, %v402
      %v411 = vadd.s32 %v407, %v403
      %vm412 = vcmp.lt.s32.totalorder %v408, 16
      %vm413 = vcmp.lt.s32.totalorder %v409, 16
      %vm414 = vcmp.lt.s32.totalorder %v410, 16
      %vm415 = vcmp.lt.s32.totalorder %v411, 16
      %vm416 = vcmp.eq.s32.totalorder %v408, 16
      %vm417 = vcmp.eq.s32.totalorder %v409, 16
      %vm418 = vcmp.eq.s32.totalorder %v410, 16
      %vm419 = vcmp.eq.s32.totalorder %v411, 16
      %vm420 = vcmp.lt.s32.totalorder %v405, 0
      %vm421 = vmand %vm416, %vm420
      %vm422 = vmand %vm417, %vm420
      %vm423 = vmand %vm418, %vm420
      %vm424 = vmand %vm419, %vm420
      %vm425 = vmor %vm412, %vm421
      %vm426 = vmor %vm413, %vm422
      %vm427 = vmor %vm414, %vm423
      %vm428 = vmor %vm415, %vm424
      %v429 = vsel %vm425, %v391, 0.0
      %v430 = vsel %vm426, %v392, 0.0
      %v431 = vsel %vm427, %v393, 0.0
      %v432 = vsel %vm428, %v394, 0.0
      %v433 = vsel %vm425, %v330, 0.0
      %v434 = vsel %vm426, %v331, 0.0
      %v435 = vsel %vm427, %v332, 0.0
      %v436 = vsel %vm428, %v333, 0.0
      %v437 = vsel %vm425, %v318, 0.0
      %v438 = vsel %vm426, %v319, 0.0
      %v439 = vsel %vm427, %v320, 0.0
      %v440 = vsel %vm428, %v321, 0.0
      %v441 = vsel %vm425, %v310, 0.0
      %v442 = vsel %vm426, %v311, 0.0
      %v443 = vsel %vm427, %v312, 0.0
      %v444 = vsel %vm428, %v313, 0.0
      %v445 = vsel %vm425, %v395, 0.0
      %v446 = vsel %vm426, %v396, 0.0
      %v447 = vsel %vm427, %v397, 0.0
      %v448 = vsel %vm428, %v398, 0.0
      %v449 = vadd.f32 %v429, %v430
      %v450 = vadd.f32 %v449, %v431
      %v451 = vadd.f32 %v450, %v432
      %v452 = vadd.f32 %v451, 0.0
      %v453 = vadd.f32 %v433, %v434
      %v454 = vadd.f32 %v453, %v435
      %v455 = vadd.f32 %v454, %v436
      %v456 = vadd.f32 %v455, 0.0
      %v457 = vadd.f32 %v437, %v438
      %v458 = vadd.f32 %v457, %v439
      %v459 = vadd.f32 %v458, %v440
      %v460 = vadd.f32 %v459, 0.0
      %v461 = vadd.f32 %v441, %v442
      %v462 = vadd.f32 %v461, %v443
      %v463 = vadd.f32 %v462, %v444
      %v464 = vadd.f32 %v463, 0.0
      %v465 = vadd.f32 %v445, %v446
      %v466 = vadd.f32 %v465, %v447
      %v467 = vadd.f32 %v466, %v448
      %v468 = vadd.f32 %v467, 0.0
      %v469 = vld [vmem:[#allocation10] sm:$0xff]
      %v470 = vadd.f32 %v469, %v452
      %471 = vst [vmem:[#allocation10] sm:$0xff] %v470
      %s472 = scalar_lea.vmem [#allocation10], 8
      %v473 = vld [vmem:[%s472] sm:$0xff]
      %v474 = vadd.f32 %v473, %v456
      %475 = vst [vmem:[%s472] sm:$0xff] %v474
      %s476 = scalar_lea.vmem [#allocation10], 16
      %v477 = vld [vmem:[%s476] sm:$0xff]
      %v478 = vadd.f32 %v477, %v460
      %479 = vst [vmem:[%s476] sm:$0xff] %v478
      %s480 = scalar_lea.vmem [#allocation10], 24
      %v481 = vld [vmem:[%s480] sm:$0xff]
      %v482 = vadd.f32 %v481, %v464
      %483 = vst [vmem:[%s480] sm:$0xff] %v482
      %s484 = scalar_lea.vmem [#allocation10], 32
      %v485 = vld [vmem:[%s484] sm:$0xff]
      %v486 = vadd.f32 %v485, %v468
      %487 = vst [vmem:[%s484] sm:$0xff] %v486
    $region45: #{tpu_custom_call.1} parent=1 // pred_fallthru
      _
    // Predicated region
    $region46: #{tpu_custom_call.1} parent=1 // pred_check
      _
    $region47: #{tpu_custom_call.1} parent=1 // pred_check_branch
      %489 = sbr.rel (0) target = $region49
    $region48: #{tpu_custom_call.1} parent=1 // pred_region
      %s491 = ssub.s32 640, 640
      %492 = vsyncadd [#allocation4], %s491
      %s493 = sshll.u32 [#allocation10], 4
      %s494 = int_to_ptr.vmem [resolvable:$true] %s493
      %499 = dma.vmem_to_hbm [thread:$0]  %s494, 640, %s4, [#allocation4], 128, 128, 8
    $region49: #{tpu_custom_call.1} parent=1 // pred_fallthru
      _
    // Predicated region
    $region50: #{tpu_custom_call.1} parent=1 // pred_check
      _
    $region51: #{tpu_custom_call.1} parent=1 // pred_check_branch
      %501 = sbr.rel (0) target = $region53
    $region52: #{tpu_custom_call.1} parent=1 // pred_region
      %502 = dma.done [#allocation4], 640
    $region53: #{tpu_custom_call.1} parent=1 // pred_fallthru
      _
    %503 = vsyncpa [#allocation3], 1
    %504 = vsyncpa [#allocation6], 1
    %505 = vsyncpa [#allocation9], 1
    %506 = vsyncpa [#allocation4], 1

</llo_original>
